<compile_context>
chip_gen: v6e
topology: v6e:2x2x1
jax: 0.10.0
libtpu: 0.0.40
codegen_flags: <defaults>
</compile_context>

<pallas_src>
import functools

import jax
import jax.numpy as jnp
from jax import lax
from jax.experimental import pallas as pl
from jax.experimental.pallas import tpu as pltpu

HIDDEN = 32
INPUT_SIZE = 1


def _round_up(n, m):
    return ((n + m - 1) // m) * m


def _rnn_kernel(x_ref, h0_ref, wih_ref, whh_t_ref, bias_ref, wfc_ref, bfc_ref,
                out_ref, hlast_ref, pre_ref, hs_ref, *, num_steps, unroll):
    """Single-invocation RNN; whole sequence, weights and hidden state live in VMEM.

    x_ref:     [T, B_pad, 1]   time-major input (input_size=1 kept as lane dim)
    h0_ref:    [B_pad, H]      initial hidden state (H on lanes)
    wih_ref:   [1, H]          W_ih^T row
    whh_t_ref: [H, H]          W_hh^T  (recurrence is h @ W_hh^T)
    bias_ref:  [1, H]          b_ih + b_hh (fused)
    wfc_ref:   [1, H]          W_fc row
    bfc_ref:   [1, 1]          b_fc
    out_ref:   [T, B_pad]      per-timestep FC outputs (time-major)
    hlast_ref: [B_pad, H]      final hidden state
    pre_ref:   [T, B_pad, H]   VMEM scratch: hoisted input projection + bias
    hs_ref:    [T, B_pad, H]   VMEM scratch: hidden states for the batched FC head
    """
    wih = wih_ref[...]        # [1, H]
    bias = bias_ref[...]      # [1, H]
    whh_t = whh_t_ref[...]    # [H, H] loop-invariant MXU RHS

    # 1) Hoist input projection + fused bias out of the recurrence: one broadcast
    #    multiply over the whole sequence slab (VPU), zero per-step work.
    pre_ref[...] = x_ref[...] * wih[None, :, :] + bias[None, :, :]   # [T, B_pad, H]

    # 2) Serial recurrence: per step only MXU dot + add + tanh (the latency chain);
    #    the hs store is off the critical path.
    def step(t, h):
        h_new = jnp.tanh(pre_ref[t] +
                         jnp.dot(h, whh_t, preferred_element_type=jnp.float32))
        hs_ref[t] = h_new
        return h_new

    h_final = lax.fori_loop(0, num_steps, step, h0_ref[...], unroll=unroll)
    hlast_ref[...] = h_final

    # 3) FC head for all timesteps at once: one batched cross-lane reduce and one
    #    full-slab store.
    wfc = wfc_ref[...]                                               # [1, H]
    out_ref[...] = (jnp.sum(hs_ref[...] * wfc[None, :, :], axis=-1)  # [T, B_pad]
                    + bfc_ref[...])


def rnn_forward(x, h_state, params):
    """x: [B, T, 1] float32; h_state: None or [1, B, H]; returns ([B, T, 1], [1, B, H])."""
    B, T, _ = x.shape
    H = HIDDEN
    B_pad = _round_up(B, 8)

    w_ih, w_hh, b_ih, b_hh, w_fc, b_fc = (params[k] for k in
                                          ("w_ih", "w_hh", "b_ih", "b_hh", "w_fc", "b_fc"))

    # Time-major input, batch padded to a sublane multiple: [T, B_pad, 1].
    x_tm = jnp.transpose(x.astype(jnp.float32), (1, 0, 2))
    if B_pad != B:
        x_tm = jnp.pad(x_tm, ((0, 0), (0, B_pad - B), (0, 0)))

    # Batch-major initial hidden state [B_pad, H] (H on lanes -> h is one vreg).
    if h_state is None:
        h0 = jnp.zeros((B_pad, H), jnp.float32)
    else:
        h0 = jnp.zeros((B_pad, H), jnp.float32).at[:B].set(h_state[0].astype(jnp.float32))

    wih_row = w_ih.reshape(1, H).astype(jnp.float32)              # W_ih^T as a row
    whh_t = w_hh.T.astype(jnp.float32)                            # W_hh^T (MXU RHS)
    bias_row = (b_ih + b_hh).reshape(1, H).astype(jnp.float32)    # fused bias
    wfc_row = w_fc.reshape(1, H).astype(jnp.float32)
    bfc = b_fc.reshape(1, 1).astype(jnp.float32)

    vmem_spec = pl.BlockSpec(memory_space=pltpu.MemorySpace.VMEM)  # whole array, VMEM-resident

    out_tm, h_last = pl.pallas_call(
        functools.partial(_rnn_kernel, num_steps=T, unroll=min(T, 8)),
        out_shape=(jax.ShapeDtypeStruct((T, B_pad), jnp.float32),
                   jax.ShapeDtypeStruct((B_pad, H), jnp.float32)),
        in_specs=[vmem_spec] * 7,
        out_specs=(vmem_spec, vmem_spec),
        scratch_shapes=[pltpu.VMEM((T, B_pad, H), jnp.float32),   # hoisted input projection
                        pltpu.VMEM((T, B_pad, H), jnp.float32)],  # per-step hidden states
    )(x_tm, h0, wih_row, whh_t, bias_row, wfc_row, bfc)

    out = jnp.transpose(out_tm[:, :B], (1, 0))[..., None]          # [B, T, 1]
    h_last_out = h_last[:B][None]                                  # [1, B, H]
    return out, h_last_out


def init_params(key):
    """Deterministic PyTorch-style init: U(-1/sqrt(H), 1/sqrt(H))."""
    H = HIDDEN
    k1, k2, k3, k4, k5, k6 = jax.random.split(key, 6)
    bound = 1.0 / jnp.sqrt(float(H))
    u = lambda k, shape: jax.random.uniform(k, shape, jnp.float32, -bound, bound)
    return {
        "w_ih": u(k1, (H, INPUT_SIZE)),
        "w_hh": u(k2, (H, H)),
        "b_ih": u(k3, (H,)),
        "b_hh": u(k4, (H,)),
        "w_fc": u(k5, (1, H)),
        "b_fc": u(k6, (1,)),
    }


def rnn_reference(x, h_state, params):
    """Pure-JAX reference matching PyTorch nn.RNN + per-timestep Linear."""
    B, T, _ = x.shape
    h = jnp.zeros((B, HIDDEN), jnp.float32) if h_state is None else h_state[0]
    outs = []
    for t in range(T):
        pre = (x[:, t, :] @ params["w_ih"].T + params["b_ih"]
               + h @ params["w_hh"].T + params["b_hh"])
        h = jnp.tanh(pre)
        outs.append(h @ params["w_fc"].T + params["b_fc"])
    return jnp.stack(outs, axis=1), h[None]


if __name__ == "__main__":
    key = jax.random.PRNGKey(0)
    kp, kx = jax.random.split(key)
    params = init_params(kp)

    B, T = 2, 8
    x = jax.random.normal(kx, (B, T, INPUT_SIZE), jnp.float32)
    h_state = None   # matches the module's initial call with h_state=None

    out, h_last = rnn_forward(x, h_state, params)
    out = jax.block_until_ready(out)
    h_last = jax.block_until_ready(h_last)

    ref_out, ref_h = rnn_reference(x, h_state, params)
    assert out.shape == (B, T, 1) and h_last.shape == (1, B, HIDDEN)
    assert jnp.allclose(out, ref_out, atol=1e-5, rtol=1e-5)
    assert jnp.allclose(h_last, ref_h, atol=1e-5, rtol=1e-5)

    print("KERNEL_OK")
</pallas_src>

<mosaic_0001>
module attributes {stable_mosaic.version = 11 : i64} {
  func.func @_rnn_kernel(%arg0: memref<8x8x1xf32, #tpu.memory_space<vmem>>, %arg1: memref<8x32xf32, #tpu.memory_space<vmem>>, %arg2: memref<1x32xf32, #tpu.memory_space<vmem>>, %arg3: memref<32x32xf32, #tpu.memory_space<vmem>>, %arg4: memref<1x32xf32, #tpu.memory_space<vmem>>, %arg5: memref<1x32xf32, #tpu.memory_space<vmem>>, %arg6: memref<1x1xf32, #tpu.memory_space<vmem>>, %arg7: memref<8x8xf32, #tpu.memory_space<vmem>>, %arg8: memref<8x32xf32, #tpu.memory_space<vmem>>, %arg9: memref<8x8x32xf32, #tpu.memory_space<vmem>>, %arg10: memref<8x8x32xf32, #tpu.memory_space<vmem>>) attributes {dimension_semantics = [], scalar_prefetch = 0 : i64, scratch_operands = 2 : i64, tpu.core_type = #tpu.core_type<tc>} {
    %c0 = arith.constant 0 : index
    %c0_0 = arith.constant 0 : index
    %0 = vector.load %arg2[%c0, %c0_0] : memref<1x32xf32, #tpu.memory_space<vmem>>, vector<1x32xf32>
    %c0_1 = arith.constant 0 : index
    %c0_2 = arith.constant 0 : index
    %1 = vector.load %arg4[%c0_1, %c0_2] : memref<1x32xf32, #tpu.memory_space<vmem>>, vector<1x32xf32>
    %c0_3 = arith.constant 0 : index
    %c0_4 = arith.constant 0 : index
    %2 = vector.load %arg3[%c0_3, %c0_4] : memref<32x32xf32, #tpu.memory_space<vmem>>, vector<32x32xf32>
    %c0_5 = arith.constant 0 : index
    %c0_6 = arith.constant 0 : index
    %c0_7 = arith.constant 0 : index
    %3 = vector.load %arg0[%c0_5, %c0_6, %c0_7] : memref<8x8x1xf32, #tpu.memory_space<vmem>>, vector<8x8x1xf32>
    %4 = vector.shape_cast %0 : vector<1x32xf32> to vector<1x1x32xf32>
    %5 = vector.broadcast %3 : vector<8x8x1xf32> to vector<8x8x32xf32>
    %6 = vector.broadcast %4 : vector<1x1x32xf32> to vector<8x8x32xf32>
    %7 = arith.mulf %5, %6 : vector<8x8x32xf32>
    %8 = vector.shape_cast %1 : vector<1x32xf32> to vector<1x1x32xf32>
    %9 = vector.broadcast %8 : vector<1x1x32xf32> to vector<8x8x32xf32>
    %10 = arith.addf %7, %9 : vector<8x8x32xf32>
    %c0_8 = arith.constant 0 : index
    %c0_9 = arith.constant 0 : index
    %c0_10 = arith.constant 0 : index
    %11 = vector.load %arg9[%c0_8, %c0_9, %c0_10] : memref<8x8x32xf32, #tpu.memory_space<vmem>>, vector<8x8x32xf32>
    tpu.vector_store %arg9[%c0_8, %c0_9, %c0_10], %10 {strides = array<i32>} : memref<8x8x32xf32, #tpu.memory_space<vmem>>, vector<8x8x32xf32>,
    %c0_11 = arith.constant 0 : index
    %c0_12 = arith.constant 0 : index
    %12 = vector.load %arg1[%c0_11, %c0_12] : memref<8x32xf32, #tpu.memory_space<vmem>>, vector<8x32xf32>
    %c0_i32 = arith.constant 0 : i32
    %13 = arith.index_cast %c0_i32 : i32 to index
    %c0_13 = arith.constant 0 : index
    %c0_14 = arith.constant 0 : index
    %14 = vector.load %arg9[%13, %c0_13, %c0_14] : memref<8x8x32xf32, #tpu.memory_space<vmem>>, vector<1x8x32xf32>
    %15 = vector.shape_cast %14 : vector<1x8x32xf32> to vector<8x32xf32>
    %cst = arith.constant dense<0.000000e+00> : vector<8x32xf32>
    %16 = tpu.matmul %12, %2, %cst {dimension_numbers = #tpu.dot_dimension_numbers<[1], [0], [0], [1], [0, 0, 1, 1], [], []>} : vector<8x32xf32>, vector<32x32xf32>, vector<8x32xf32> -> vector<8x32xf32>
    %17 = arith.addf %15, %16 : vector<8x32xf32>
    %18 = math.tanh %17 : vector<8x32xf32>
    %19 = arith.index_cast %c0_i32 : i32 to index
    %c0_15 = arith.constant 0 : index
    %c0_16 = arith.constant 0 : index
    %20 = vector.load %arg10[%19, %c0_15, %c0_16] : memref<8x8x32xf32, #tpu.memory_space<vmem>>, vector<1x8x32xf32>
    %21 = vector.shape_cast %20 : vector<1x8x32xf32> to vector<8x32xf32>
    %22 = vector.shape_cast %18 : vector<8x32xf32> to vector<1x8x32xf32>
    tpu.vector_store %arg10[%19, %c0_15, %c0_16], %22 {strides = array<i32>} : memref<8x8x32xf32, #tpu.memory_space<vmem>>, vector<1x8x32xf32>,
    %c1_i32 = arith.constant 1 : i32
    %23 = arith.index_cast %c1_i32 : i32 to index
    %c0_17 = arith.constant 0 : index
    %c0_18 = arith.constant 0 : index
    %24 = vector.load %arg9[%23, %c0_17, %c0_18] : memref<8x8x32xf32, #tpu.memory_space<vmem>>, vector<1x8x32xf32>
    %25 = vector.shape_cast %24 : vector<1x8x32xf32> to vector<8x32xf32>
    %cst_19 = arith.constant dense<0.000000e+00> : vector<8x32xf32>
    %26 = tpu.matmul %18, %2, %cst_19 {dimension_numbers = #tpu.dot_dimension_numbers<[1], [0], [0], [1], [0, 0, 1, 1], [], []>} : vector<8x32xf32>, vector<32x32xf32>, vector<8x32xf32> -> vector<8x32xf32>
    %27 = arith.addf %25, %26 : vector<8x32xf32>
    %28 = math.tanh %27 : vector<8x32xf32>
    %29 = arith.index_cast %c1_i32 : i32 to index
    %c0_20 = arith.constant 0 : index
    %c0_21 = arith.constant 0 : index
    %30 = vector.load %arg10[%29, %c0_20, %c0_21] : memref<8x8x32xf32, #tpu.memory_space<vmem>>, vector<1x8x32xf32>
    %31 = vector.shape_cast %30 : vector<1x8x32xf32> to vector<8x32xf32>
    %32 = vector.shape_cast %28 : vector<8x32xf32> to vector<1x8x32xf32>
    tpu.vector_store %arg10[%29, %c0_20, %c0_21], %32 {strides = array<i32>} : memref<8x8x32xf32, #tpu.memory_space<vmem>>, vector<1x8x32xf32>,
    %c2_i32 = arith.constant 2 : i32
    %33 = arith.index_cast %c2_i32 : i32 to index
    %c0_22 = arith.constant 0 : index
    %c0_23 = arith.constant 0 : index
    %34 = vector.load %arg9[%33, %c0_22, %c0_23] : memref<8x8x32xf32, #tpu.memory_space<vmem>>, vector<1x8x32xf32>
    %35 = vector.shape_cast %34 : vector<1x8x32xf32> to vector<8x32xf32>
    %cst_24 = arith.constant dense<0.000000e+00> : vector<8x32xf32>
    %36 = tpu.matmul %28, %2, %cst_24 {dimension_numbers = #tpu.dot_dimension_numbers<[1], [0], [0], [1], [0, 0, 1, 1], [], []>} : vector<8x32xf32>, vector<32x32xf32>, vector<8x32xf32> -> vector<8x32xf32>
    %37 = arith.addf %35, %36 : vector<8x32xf32>
    %38 = math.tanh %37 : vector<8x32xf32>
    %39 = arith.index_cast %c2_i32 : i32 to index
    %c0_25 = arith.constant 0 : index
    %c0_26 = arith.constant 0 : index
    %40 = vector.load %arg10[%39, %c0_25, %c0_26] : memref<8x8x32xf32, #tpu.memory_space<vmem>>, vector<1x8x32xf32>
    %41 = vector.shape_cast %40 : vector<1x8x32xf32> to vector<8x32xf32>
    %42 = vector.shape_cast %38 : vector<8x32xf32> to vector<1x8x32xf32>
    tpu.vector_store %arg10[%39, %c0_25, %c0_26], %42 {strides = array<i32>} : memref<8x8x32xf32, #tpu.memory_space<vmem>>, vector<1x8x32xf32>,
    %c3_i32 = arith.constant 3 : i32
    %43 = arith.index_cast %c3_i32 : i32 to index
    %c0_27 = arith.constant 0 : index
    %c0_28 = arith.constant 0 : index
    %44 = vector.load %arg9[%43, %c0_27, %c0_28] : memref<8x8x32xf32, #tpu.memory_space<vmem>>, vector<1x8x32xf32>
    %45 = vector.shape_cast %44 : vector<1x8x32xf32> to vector<8x32xf32>
    %cst_29 = arith.constant dense<0.000000e+00> : vector<8x32xf32>
    %46 = tpu.matmul %38, %2, %cst_29 {dimension_numbers = #tpu.dot_dimension_numbers<[1], [0], [0], [1], [0, 0, 1, 1], [], []>} : vector<8x32xf32>, vector<32x32xf32>, vector<8x32xf32> -> vector<8x32xf32>
    %47 = arith.addf %45, %46 : vector<8x32xf32>
    %48 = math.tanh %47 : vector<8x32xf32>
    %49 = arith.index_cast %c3_i32 : i32 to index
    %c0_30 = arith.constant 0 : index
    %c0_31 = arith.constant 0 : index
    %50 = vector.load %arg10[%49, %c0_30, %c0_31] : memref<8x8x32xf32, #tpu.memory_space<vmem>>, vector<1x8x32xf32>
    %51 = vector.shape_cast %50 : vector<1x8x32xf32> to vector<8x32xf32>
    %52 = vector.shape_cast %48 : vector<8x32xf32> to vector<1x8x32xf32>
    tpu.vector_store %arg10[%49, %c0_30, %c0_31], %52 {strides = array<i32>} : memref<8x8x32xf32, #tpu.memory_space<vmem>>, vector<1x8x32xf32>,
    %c4_i32 = arith.constant 4 : i32
    %53 = arith.index_cast %c4_i32 : i32 to index
    %c0_32 = arith.constant 0 : index
    %c0_33 = arith.constant 0 : index
    %54 = vector.load %arg9[%53, %c0_32, %c0_33] : memref<8x8x32xf32, #tpu.memory_space<vmem>>, vector<1x8x32xf32>
    %55 = vector.shape_cast %54 : vector<1x8x32xf32> to vector<8x32xf32>
    %cst_34 = arith.constant dense<0.000000e+00> : vector<8x32xf32>
    %56 = tpu.matmul %48, %2, %cst_34 {dimension_numbers = #tpu.dot_dimension_numbers<[1], [0], [0], [1], [0, 0, 1, 1], [], []>} : vector<8x32xf32>, vector<32x32xf32>, vector<8x32xf32> -> vector<8x32xf32>
    %57 = arith.addf %55, %56 : vector<8x32xf32>
    %58 = math.tanh %57 : vector<8x32xf32>
    %59 = arith.index_cast %c4_i32 : i32 to index
    %c0_35 = arith.constant 0 : index
    %c0_36 = arith.constant 0 : index
    %60 = vector.load %arg10[%59, %c0_35, %c0_36] : memref<8x8x32xf32, #tpu.memory_space<vmem>>, vector<1x8x32xf32>
    %61 = vector.shape_cast %60 : vector<1x8x32xf32> to vector<8x32xf32>
    %62 = vector.shape_cast %58 : vector<8x32xf32> to vector<1x8x32xf32>
    tpu.vector_store %arg10[%59, %c0_35, %c0_36], %62 {strides = array<i32>} : memref<8x8x32xf32, #tpu.memory_space<vmem>>, vector<1x8x32xf32>,
    %c5_i32 = arith.constant 5 : i32
    %63 = arith.index_cast %c5_i32 : i32 to index
    %c0_37 = arith.constant 0 : index
    %c0_38 = arith.constant 0 : index
    %64 = vector.load %arg9[%63, %c0_37, %c0_38] : memref<8x8x32xf32, #tpu.memory_space<vmem>>, vector<1x8x32xf32>
    %65 = vector.shape_cast %64 : vector<1x8x32xf32> to vector<8x32xf32>
    %cst_39 = arith.constant dense<0.000000e+00> : vector<8x32xf32>
    %66 = tpu.matmul %58, %2, %cst_39 {dimension_numbers = #tpu.dot_dimension_numbers<[1], [0], [0], [1], [0, 0, 1, 1], [], []>} : vector<8x32xf32>, vector<32x32xf32>, vector<8x32xf32> -> vector<8x32xf32>
    %67 = arith.addf %65, %66 : vector<8x32xf32>
    %68 = math.tanh %67 : vector<8x32xf32>
    %69 = arith.index_cast %c5_i32 : i32 to index
    %c0_40 = arith.constant 0 : index
    %c0_41 = arith.constant 0 : index
    %70 = vector.load %arg10[%69, %c0_40, %c0_41] : memref<8x8x32xf32, #tpu.memory_space<vmem>>, vector<1x8x32xf32>
    %71 = vector.shape_cast %70 : vector<1x8x32xf32> to vector<8x32xf32>
    %72 = vector.shape_cast %68 : vector<8x32xf32> to vector<1x8x32xf32>
    tpu.vector_store %arg10[%69, %c0_40, %c0_41], %72 {strides = array<i32>} : memref<8x8x32xf32, #tpu.memory_space<vmem>>, vector<1x8x32xf32>,
    %c6_i32 = arith.constant 6 : i32
    %73 = arith.index_cast %c6_i32 : i32 to index
    %c0_42 = arith.constant 0 : index
    %c0_43 = arith.constant 0 : index
    %74 = vector.load %arg9[%73, %c0_42, %c0_43] : memref<8x8x32xf32, #tpu.memory_space<vmem>>, vector<1x8x32xf32>
    %75 = vector.shape_cast %74 : vector<1x8x32xf32> to vector<8x32xf32>
    %cst_44 = arith.constant dense<0.000000e+00> : vector<8x32xf32>
    %76 = tpu.matmul %68, %2, %cst_44 {dimension_numbers = #tpu.dot_dimension_numbers<[1], [0], [0], [1], [0, 0, 1, 1], [], []>} : vector<8x32xf32>, vector<32x32xf32>, vector<8x32xf32> -> vector<8x32xf32>
    %77 = arith.addf %75, %76 : vector<8x32xf32>
    %78 = math.tanh %77 : vector<8x32xf32>
    %79 = arith.index_cast %c6_i32 : i32 to index
    %c0_45 = arith.constant 0 : index
    %c0_46 = arith.constant 0 : index
    %80 = vector.load %arg10[%79, %c0_45, %c0_46] : memref<8x8x32xf32, #tpu.memory_space<vmem>>, vector<1x8x32xf32>
    %81 = vector.shape_cast %80 : vector<1x8x32xf32> to vector<8x32xf32>
    %82 = vector.shape_cast %78 : vector<8x32xf32> to vector<1x8x32xf32>
    tpu.vector_store %arg10[%79, %c0_45, %c0_46], %82 {strides = array<i32>} : memref<8x8x32xf32, #tpu.memory_space<vmem>>, vector<1x8x32xf32>,
    %c7_i32 = arith.constant 7 : i32
    %83 = arith.index_cast %c7_i32 : i32 to index
    %c0_47 = arith.constant 0 : index
    %c0_48 = arith.constant 0 : index
    %84 = vector.load %arg9[%83, %c0_47, %c0_48] : memref<8x8x32xf32, #tpu.memory_space<vmem>>, vector<1x8x32xf32>
    %85 = vector.shape_cast %84 : vector<1x8x32xf32> to vector<8x32xf32>
    %cst_49 = arith.constant dense<0.000000e+00> : vector<8x32xf32>
    %86 = tpu.matmul %78, %2, %cst_49 {dimension_numbers = #tpu.dot_dimension_numbers<[1], [0], [0], [1], [0, 0, 1, 1], [], []>} : vector<8x32xf32>, vector<32x32xf32>, vector<8x32xf32> -> vector<8x32xf32>
    %87 = arith.addf %85, %86 : vector<8x32xf32>
    %88 = math.tanh %87 : vector<8x32xf32>
    %89 = arith.index_cast %c7_i32 : i32 to index
    %c0_50 = arith.constant 0 : index
    %c0_51 = arith.constant 0 : index
    %90 = vector.load %arg10[%89, %c0_50, %c0_51] : memref<8x8x32xf32, #tpu.memory_space<vmem>>, vector<1x8x32xf32>
    %91 = vector.shape_cast %90 : vector<1x8x32xf32> to vector<8x32xf32>
    %92 = vector.shape_cast %88 : vector<8x32xf32> to vector<1x8x32xf32>
    tpu.vector_store %arg10[%89, %c0_50, %c0_51], %92 {strides = array<i32>} : memref<8x8x32xf32, #tpu.memory_space<vmem>>, vector<1x8x32xf32>,
    %c8_i32 = arith.constant 8 : i32
    %c0_52 = arith.constant 0 : index
    %c0_53 = arith.constant 0 : index
    %93 = vector.load %arg8[%c0_52, %c0_53] : memref<8x32xf32, #tpu.memory_space<vmem>>, vector<8x32xf32>
    tpu.vector_store %arg8[%c0_52, %c0_53], %88 {strides = array<i32>} : memref<8x32xf32, #tpu.memory_space<vmem>>, vector<8x32xf32>,
    %c0_54 = arith.constant 0 : index
    %c0_55 = arith.constant 0 : index
    %94 = vector.load %arg5[%c0_54, %c0_55] : memref<1x32xf32, #tpu.memory_space<vmem>>, vector<1x32xf32>
    %c0_56 = arith.constant 0 : index
    %c0_57 = arith.constant 0 : index
    %c0_58 = arith.constant 0 : index
    %95 = vector.load %arg10[%c0_56, %c0_57, %c0_58] : memref<8x8x32xf32, #tpu.memory_space<vmem>>, vector<8x8x32xf32>
    %96 = vector.shape_cast %94 : vector<1x32xf32> to vector<1x1x32xf32>
    %97 = vector.broadcast %96 : vector<1x1x32xf32> to vector<8x8x32xf32>
    %98 = arith.mulf %95, %97 : vector<8x8x32xf32>
    %cst_59 = arith.constant dense<0.000000e+00> : vector<8x8xf32>
    %99 = vector.multi_reduction <add>, %98, %cst_59 [2] : vector<8x8x32xf32> to vector<8x8xf32>
    %c0_60 = arith.constant 0 : index
    %c0_61 = arith.constant 0 : index
    %100 = vector.load %arg6[%c0_60, %c0_61] : memref<1x1xf32, #tpu.memory_space<vmem>>, vector<1x1xf32>
    %101 = vector.broadcast %100 : vector<1x1xf32> to vector<8x8xf32>
    %102 = arith.addf %99, %101 : vector<8x8xf32>
    %c0_62 = arith.constant 0 : index
    %c0_63 = arith.constant 0 : index
    %103 = vector.load %arg7[%c0_62, %c0_63] : memref<8x8xf32, #tpu.memory_space<vmem>>, vector<8x8xf32>
    tpu.vector_store %arg7[%c0_62, %c0_63], %102 {strides = array<i32>} : memref<8x8xf32, #tpu.memory_space<vmem>>, vector<8x8xf32>,
    return
  }
}

</mosaic_0001>

<llo_original>
// kernel: tpu_custom_call.1
$region0: #{tpu_custom_call.1}
  #allocation0 [shape = 'u32[]', space=smem, size = 0x4, offset = 0x4, fixed_abs, tag = 'smem constant byte address 0x4 - core index']
  #allocation1 [shape = 'u32[144,128]{1,0:T(1,128)}', space=vmem, size = 0x12000, scoped, tag = 'internal scratch']
  #allocation2 [shape = 'f32[8,8,32]{2,1,0:T(8,128)}', space=vmem, size = 0x8000, scoped, tag = 'scratch operand']
  #allocation3 [shape = 'f32[8,8,32]{2,1,0:T(8,128)}', space=vmem, size = 0x8000, scoped, tag = 'scratch operand']
  #allocation4 [shape = 'f32[1,1]{1,0:T(1,128)S(1)}', space=vmem, size = 0x200, scoped, tag = 'scoped memory for tpu_custom_call.1']
  %s0 = inlined_call_operand.vmem [shape: f32[8,8,1], index: 0, kind: input, shape index: {}]
  %s1 = inlined_call_operand.vmem [shape: f32[8,32], index: 1, kind: input, shape index: {}]
  %s2 = inlined_call_operand.vmem [shape: f32[1,32], index: 2, kind: input, shape index: {}]
  %s3 = inlined_call_operand.vmem [shape: f32[32,32], index: 3, kind: input, shape index: {}]
  %s4 = inlined_call_operand.vmem [shape: f32[1,32], index: 4, kind: input, shape index: {}]
  %s5 = inlined_call_operand.vmem [shape: f32[1,32], index: 5, kind: input, shape index: {}]
  %s6 = inlined_call_operand.<no memory space> [shape: f32[1,1], index: 6, kind: input, shape index: {}]
  %s7 = inlined_call_operand.hbm [shape: f32[8,8], index: 7, kind: output, shape index: {0}]
  %s8 = inlined_call_operand.hbm [shape: f32[8,32], index: 8, kind: output, shape index: {1}]
  %9 = xla_tuple %s7, %s8
  %s10 = sld [smem:[#allocation0]]
  $region46: #{tpu_custom_call.1} parent=0
    _
  %s12 = ssub.s32 1, %s10
  %s13 = scalar_select 0, %s12, %s10
  %v14 = vstv %s6
  %15 = vst [vmem:[#allocation4] sm:$0x1] %v14
  $region1: #{tpu_custom_call.1} parent=0
    #allocation5 [shape = 'u8[4096]{0}', space=vmem, size = 0x1000, scoped, tag = 'output window, operand 0, single buffered']
    #allocation6 [shape = 's32[1]{0}', space=sflag, size = 0x4, scoped, tag = 'scoped memory for tpu_custom_call.1']
    #allocation7 [shape = 'u8[4096]{0}', space=vmem, size = 0x1000, scoped, tag = 'output window, operand 1, single buffered']
    #allocation8 [shape = 's32[1]{0}', space=sflag, size = 0x4, scoped, tag = 'scoped memory for tpu_custom_call.1']
    %16 = vsyncpa [#allocation6], 0
    %17 = vsyncpa [#allocation8], 0
    // Predicated region
    $region2: #{tpu_custom_call.1} parent=1 // pred_check
      _
    $region3: #{tpu_custom_call.1} parent=1 // pred_check_branch
      %19 = sbr.rel (0) target = $region5
    $region4: #{tpu_custom_call.1} parent=1 // pred_region
      _
    $region5: #{tpu_custom_call.1} parent=1 // pred_fallthru
      _
    // Predicated region
    $region6: #{tpu_custom_call.1} parent=1 // pred_check
      _
    $region7: #{tpu_custom_call.1} parent=1 // pred_check_branch
      %21 = sbr.rel (0) target = $region9
    $region8: #{tpu_custom_call.1} parent=1 // pred_region
      _
    $region9: #{tpu_custom_call.1} parent=1 // pred_fallthru
      _
    // Predicated region
    $region10: #{tpu_custom_call.1} parent=1 // pred_check
      _
    $region11: #{tpu_custom_call.1} parent=1 // pred_check_branch
      %23 = sbr.rel (0) target = $region13
    $region12: #{tpu_custom_call.1} parent=1 // pred_region
      _
    $region13: #{tpu_custom_call.1} parent=1 // pred_fallthru
      _
    // Predicated region
    $region14: #{tpu_custom_call.1} parent=1 // pred_check
      _
    $region15: #{tpu_custom_call.1} parent=1 // pred_check_branch
      %25 = sbr.rel (0) target = $region17
    $region16: #{tpu_custom_call.1} parent=1 // pred_region
      _
    $region17: #{tpu_custom_call.1} parent=1 // pred_fallthru
      _
    // Predicated region
    $region18: #{tpu_custom_call.1} parent=1 // pred_check
      _
    $region19: #{tpu_custom_call.1} parent=1 // pred_check_branch
      %27 = sbr.rel (0) target = $region21
    $region20: #{tpu_custom_call.1} parent=1 // pred_region
      _
    $region21: #{tpu_custom_call.1} parent=1 // pred_fallthru
      _
    // Predicated region
    $region22: #{tpu_custom_call.1} parent=1 // pred_check
      _
    $region23: #{tpu_custom_call.1} parent=1 // pred_check_branch
      %29 = sbr.rel (0) target = $region25
    $region24: #{tpu_custom_call.1} parent=1 // pred_region
      _
    $region25: #{tpu_custom_call.1} parent=1 // pred_fallthru
      _
    // Predicated region
    $region26: #{tpu_custom_call.1} parent=1 // pred_check
      _
    $region27: #{tpu_custom_call.1} parent=1 // pred_check_branch
      %31 = sbr.rel (0) target = $region29
    $region28: #{tpu_custom_call.1} parent=1 // pred_region
      _
    $region29: #{tpu_custom_call.1} parent=1 // pred_fallthru
      _
    %v32 = vld [vmem:[%s2] sm:$0x1]
    %v33 = vld [vmem:[%s4] sm:$0x1]
    %v34 = vld [vmem:[%s3] sm:$0xff]
    %v35 = vld [vmem:[%s3 + $0x8] sm:$0xff]
    %v36 = vld [vmem:[%s3 + $0x10] sm:$0xff]
    %v37 = vld [vmem:[%s3 + $0x18] sm:$0xff]
    %v38 = vld [vmem:[%s0] sm:$0xff]
    %v39 = vld [vmem:[%s0 + $0x8] sm:$0xff]
    %v40 = vld [vmem:[%s0 + $0x10] sm:$0xff]
    %v41 = vld [vmem:[%s0 + $0x18] sm:$0xff]
    %v42 = vld [vmem:[%s0 + $0x20] sm:$0xff]
    %v43 = vld [vmem:[%s0 + $0x28] sm:$0xff]
    %v44 = vld [vmem:[%s0 + $0x30] sm:$0xff]
    %v45 = vld [vmem:[%s0 + $0x38] sm:$0xff]
    %47 = vset.pattern.permute.xlu0 0
    %48 = vperm.xlu0 %47, %v38
    %v49 = vpop.permute.xlu0 %48
    %52 = vset.pattern.permute.xlu0 0
    %53 = vperm.xlu0 %52, %v39
    %v54 = vpop.permute.xlu0 %53
    %57 = vset.pattern.permute.xlu0 0
    %58 = vperm.xlu0 %57, %v40
    %v59 = vpop.permute.xlu0 %58
    %62 = vset.pattern.permute.xlu0 0
    %63 = vperm.xlu0 %62, %v41
    %v64 = vpop.permute.xlu0 %63
    %67 = vset.pattern.permute.xlu0 0
    %68 = vperm.xlu0 %67, %v42
    %v69 = vpop.permute.xlu0 %68
    %72 = vset.pattern.permute.xlu0 0
    %73 = vperm.xlu0 %72, %v43
    %v74 = vpop.permute.xlu0 %73
    %77 = vset.pattern.permute.xlu0 0
    %78 = vperm.xlu0 %77, %v44
    %v79 = vpop.permute.xlu0 %78
    %82 = vset.pattern.permute.xlu0 0
    %83 = vperm.xlu0 %82, %v45
    %v84 = vpop.permute.xlu0 %83
    %v87 = vlaneseq
    %v88 = vshrl.u32 %v87, 7
    %v89 = vsub.s32 0, %v88
    %v90 = vrot.slane %v32, %v89
    %v92 = vmul.f32 %v49, %v90
    %v93 = vmul.f32 %v54, %v90
    %v94 = vmul.f32 %v59, %v90
    %v95 = vmul.f32 %v64, %v90
    %v96 = vmul.f32 %v69, %v90
    %v97 = vmul.f32 %v74, %v90
    %v98 = vmul.f32 %v79, %v90
    %v99 = vmul.f32 %v84, %v90
    %v101 = vlaneseq
    %v102 = vshrl.u32 %v101, 7
    %v103 = vsub.s32 0, %v102
    %v104 = vrot.slane %v33, %v103
    %v106 = vadd.f32 %v92, %v104
    %v107 = vadd.f32 %v93, %v104
    %v108 = vadd.f32 %v94, %v104
    %v109 = vadd.f32 %v95, %v104
    %v110 = vadd.f32 %v96, %v104
    %v111 = vadd.f32 %v97, %v104
    %v112 = vadd.f32 %v98, %v104
    %v113 = vadd.f32 %v99, %v104
    %vm114 = vcmask 261120
    %115 = vst.msk [vmem:[#allocation2] sm:$0xff] %vm114, %v106
    %116 = vst.msk [vmem:[#allocation2 + $0x8] sm:$0xff] %vm114, %v107
    %117 = vst.msk [vmem:[#allocation2 + $0x10] sm:$0xff] %vm114, %v108
    %118 = vst.msk [vmem:[#allocation2 + $0x18] sm:$0xff] %vm114, %v109
    %119 = vst.msk [vmem:[#allocation2 + $0x20] sm:$0xff] %vm114, %v110
    %120 = vst.msk [vmem:[#allocation2 + $0x28] sm:$0xff] %vm114, %v111
    %121 = vst.msk [vmem:[#allocation2 + $0x30] sm:$0xff] %vm114, %v112
    %122 = vst.msk [vmem:[#allocation2 + $0x38] sm:$0xff] %vm114, %v113
    %v123 = vld [vmem:[%s1] sm:$0xff]
    %v124 = vld [vmem:[#allocation2] sm:$0xff]
    %v126 = vsel %vm114, %v123, 0
    %128 = vmatprep.subr.mxu0 0.0
    %129 = vmatpush1.msra.mxu0 0.0
    %130 = vmatprep.subr.mxu0 0.0
    %131 = vmatpush1.msra.mxu0 0.0
    %132 = vmatprep.subr.mxu0 0.0
    %133 = vmatpush1.msra.mxu0 0.0
    %134 = vmatprep.subr.mxu0 0.0
    %135 = vmatpush1.msra.mxu0 0.0
    %136 = vmatprep.subr.mxu0 0.0
    %137 = vmatpush1.msra.mxu0 0.0
    %138 = vmatprep.subr.mxu0 0.0
    %139 = vmatpush1.msra.mxu0 0.0
    %140 = vmatprep.subr.mxu0 0.0
    %141 = vmatpush1.msra.mxu0 0.0
    %142 = vmatprep.subr.mxu0 0.0
    %143 = vmatpush1.msra.mxu0 0.0
    %144 = vmatprep.subr.mxu0 0.0
    %145 = vmatpush1.msra.mxu0 0.0
    %146 = vmatprep.subr.mxu0 0.0
    %147 = vmatpush1.msra.mxu0 0.0
    %148 = vmatprep.subr.mxu0 0.0
    %149 = vmatpush1.msra.mxu0 0.0
    %150 = vmatprep.subr.mxu0 0.0
    %151 = vmatpush1.msra.mxu0 0.0
    %152 = vmatprep.subr.mxu0 0.0
    %153 = vmatpush1.msra.mxu0 %v37
    %154 = vmatprep.subr.mxu0 0.0
    %155 = vmatpush1.msra.mxu0 %v36
    %156 = vmatprep.subr.mxu0 0.0
    %157 = vmatpush1.msra.mxu0 %v35
    %158 = vmatprep.subr.mxu0 0.0
    %159 = vmatpush1.msra.mxu0 %v34
    %160 = vmatprep.subr.mxu0 0.0
    %161 = vmatpush2.msra.mxu0 0.0
    %162 = vmatprep.subr.mxu0 0.0
    %163 = vmatpush2.msra.mxu0 0.0
    %164 = vmatprep.subr.mxu0 0.0
    %165 = vmatpush2.msra.mxu0 0.0
    %166 = vmatprep.subr.mxu0 0.0
    %167 = vmatpush2.msra.mxu0 0.0
    %168 = vmatprep.subr.mxu0 0.0
    %169 = vmatpush2.msra.mxu0 0.0
    %170 = vmatprep.subr.mxu0 0.0
    %171 = vmatpush2.msra.mxu0 0.0
    %172 = vmatprep.subr.mxu0 0.0
    %173 = vmatpush2.msra.mxu0 0.0
    %174 = vmatprep.subr.mxu0 0.0
    %175 = vmatpush2.msra.mxu0 0.0
    %176 = vmatprep.subr.mxu0 0.0
    %177 = vmatpush2.msra.mxu0 0.0
    %178 = vmatprep.subr.mxu0 0.0
    %179 = vmatpush2.msra.mxu0 0.0
    %180 = vmatprep.subr.mxu0 0.0
    %181 = vmatpush2.msra.mxu0 0.0
    %182 = vmatprep.subr.mxu0 0.0
    %183 = vmatpush2.msra.mxu0 0.0
    %184 = vmatprep.subr.mxu0 0.0
    %185 = vmatpush2.msra.mxu0 0.0
    %186 = vmatprep.subr.mxu0 0.0
    %187 = vmatpush2.msra.mxu0 0.0
    %188 = vmatprep.subr.mxu0 0.0
    %189 = vmatpush2.msra.mxu0 0.0
    %190 = vmatprep.subr.mxu0 0.0
    %191 = vmatpush2.msra.mxu0 0.0
    %192 = vmatprep.mubr.f32.mxu0 0.0
    %193 = vmatmul.mubr.f32.gmra.mxu0 %v126
    %v194 = vpop.f32.mrf.mxu0
    %v195 = vadd.f32 0.0, %v194
    %v196 = vpop.f32.mrf.mxu0
    %197 = vdwg.mxu0
    %v198 = vadd.f32 %v124, %v195
    %v199 = vtanh.pop %v198
    %200 = vst.msk [vmem:[#allocation3] sm:$0xff] %vm114, %v199
    %s201 = scalar_lea.vmem [#allocation2], 8
    %v202 = vld [vmem:[%s201] sm:$0xff]
    %v204 = vsel %vm114, %v199, 0
    %206 = vmatprep.subr.mxu0 0.0
    %207 = vmatpush1.msra.mxu0 0.0
    %208 = vmatprep.subr.mxu0 0.0
    %209 = vmatpush1.msra.mxu0 0.0
    %210 = vmatprep.subr.mxu0 0.0
    %211 = vmatpush1.msra.mxu0 0.0
    %212 = vmatprep.subr.mxu0 0.0
    %213 = vmatpush1.msra.mxu0 0.0
    %214 = vmatprep.subr.mxu0 0.0
    %215 = vmatpush1.msra.mxu0 0.0
    %216 = vmatprep.subr.mxu0 0.0
    %217 = vmatpush1.msra.mxu0 0.0
    %218 = vmatprep.subr.mxu0 0.0
    %219 = vmatpush1.msra.mxu0 0.0
    %220 = vmatprep.subr.mxu0 0.0
    %221 = vmatpush1.msra.mxu0 0.0
    %222 = vmatprep.subr.mxu0 0.0
    %223 = vmatpush1.msra.mxu0 0.0
    %224 = vmatprep.subr.mxu0 0.0
    %225 = vmatpush1.msra.mxu0 0.0
    %226 = vmatprep.subr.mxu0 0.0
    %227 = vmatpush1.msra.mxu0 0.0
    %228 = vmatprep.subr.mxu0 0.0
    %229 = vmatpush1.msra.mxu0 0.0
    %230 = vmatprep.subr.mxu0 0.0
    %231 = vmatpush1.msra.mxu0 %v37
    %232 = vmatprep.subr.mxu0 0.0
    %233 = vmatpush1.msra.mxu0 %v36
    %234 = vmatprep.subr.mxu0 0.0
    %235 = vmatpush1.msra.mxu0 %v35
    %236 = vmatprep.subr.mxu0 0.0
    %237 = vmatpush1.msra.mxu0 %v34
    %238 = vmatprep.subr.mxu0 0.0
    %239 = vmatpush2.msra.mxu0 0.0
    %240 = vmatprep.subr.mxu0 0.0
    %241 = vmatpush2.msra.mxu0 0.0
    %242 = vmatprep.subr.mxu0 0.0
    %243 = vmatpush2.msra.mxu0 0.0
    %244 = vmatprep.subr.mxu0 0.0
    %245 = vmatpush2.msra.mxu0 0.0
    %246 = vmatprep.subr.mxu0 0.0
    %247 = vmatpush2.msra.mxu0 0.0
    %248 = vmatprep.subr.mxu0 0.0
    %249 = vmatpush2.msra.mxu0 0.0
    %250 = vmatprep.subr.mxu0 0.0
    %251 = vmatpush2.msra.mxu0 0.0
    %252 = vmatprep.subr.mxu0 0.0
    %253 = vmatpush2.msra.mxu0 0.0
    %254 = vmatprep.subr.mxu0 0.0
    %255 = vmatpush2.msra.mxu0 0.0
    %256 = vmatprep.subr.mxu0 0.0
    %257 = vmatpush2.msra.mxu0 0.0
    %258 = vmatprep.subr.mxu0 0.0
    %259 = vmatpush2.msra.mxu0 0.0
    %260 = vmatprep.subr.mxu0 0.0
    %261 = vmatpush2.msra.mxu0 0.0
    %262 = vmatprep.subr.mxu0 0.0
    %263 = vmatpush2.msra.mxu0 0.0
    %264 = vmatprep.subr.mxu0 0.0
    %265 = vmatpush2.msra.mxu0 0.0
    %266 = vmatprep.subr.mxu0 0.0
    %267 = vmatpush2.msra.mxu0 0.0
    %268 = vmatprep.subr.mxu0 0.0
    %269 = vmatpush2.msra.mxu0 0.0
    %270 = vmatprep.mubr.f32.mxu0 0.0
    %271 = vmatmul.mubr.f32.gmra.mxu0 %v204
    %v272 = vpop.f32.mrf.mxu0
    %v273 = vadd.f32 0.0, %v272
    %v274 = vpop.f32.mrf.mxu0
    %275 = vdwg.mxu0
    %v276 = vadd.f32 %v202, %v273
    %v277 = vtanh.pop %v276
    %s278 = scalar_lea.vmem [#allocation3], 8
    %279 = vst.msk [vmem:[%s278] sm:$0xff] %vm114, %v277
    %s280 = scalar_lea.vmem [#allocation2], 16
    %v281 = vld [vmem:[%s280] sm:$0xff]
    %v283 = vsel %vm114, %v277, 0
    %285 = vmatprep.subr.mxu0 0.0
    %286 = vmatpush1.msra.mxu0 0.0
    %287 = vmatprep.subr.mxu0 0.0
    %288 = vmatpush1.msra.mxu0 0.0
    %289 = vmatprep.subr.mxu0 0.0
    %290 = vmatpush1.msra.mxu0 0.0
    %291 = vmatprep.subr.mxu0 0.0
    %292 = vmatpush1.msra.mxu0 0.0
    %293 = vmatprep.subr.mxu0 0.0
    %294 = vmatpush1.msra.mxu0 0.0
    %295 = vmatprep.subr.mxu0 0.0
    %296 = vmatpush1.msra.mxu0 0.0
    %297 = vmatprep.subr.mxu0 0.0
    %298 = vmatpush1.msra.mxu0 0.0
    %299 = vmatprep.subr.mxu0 0.0
    %300 = vmatpush1.msra.mxu0 0.0
    %301 = vmatprep.subr.mxu0 0.0
    %302 = vmatpush1.msra.mxu0 0.0
    %303 = vmatprep.subr.mxu0 0.0
    %304 = vmatpush1.msra.mxu0 0.0
    %305 = vmatprep.subr.mxu0 0.0
    %306 = vmatpush1.msra.mxu0 0.0
    %307 = vmatprep.subr.mxu0 0.0
    %308 = vmatpush1.msra.mxu0 0.0
    %309 = vmatprep.subr.mxu0 0.0
    %310 = vmatpush1.msra.mxu0 %v37
    %311 = vmatprep.subr.mxu0 0.0
    %312 = vmatpush1.msra.mxu0 %v36
    %313 = vmatprep.subr.mxu0 0.0
    %314 = vmatpush1.msra.mxu0 %v35
    %315 = vmatprep.subr.mxu0 0.0
    %316 = vmatpush1.msra.mxu0 %v34
    %317 = vmatprep.subr.mxu0 0.0
    %318 = vmatpush2.msra.mxu0 0.0
    %319 = vmatprep.subr.mxu0 0.0
    %320 = vmatpush2.msra.mxu0 0.0
    %321 = vmatprep.subr.mxu0 0.0
    %322 = vmatpush2.msra.mxu0 0.0
    %323 = vmatprep.subr.mxu0 0.0
    %324 = vmatpush2.msra.mxu0 0.0
    %325 = vmatprep.subr.mxu0 0.0
    %326 = vmatpush2.msra.mxu0 0.0
    %327 = vmatprep.subr.mxu0 0.0
    %328 = vmatpush2.msra.mxu0 0.0
    %329 = vmatprep.subr.mxu0 0.0
    %330 = vmatpush2.msra.mxu0 0.0
    %331 = vmatprep.subr.mxu0 0.0
    %332 = vmatpush2.msra.mxu0 0.0
    %333 = vmatprep.subr.mxu0 0.0
    %334 = vmatpush2.msra.mxu0 0.0
    %335 = vmatprep.subr.mxu0 0.0
    %336 = vmatpush2.msra.mxu0 0.0
    %337 = vmatprep.subr.mxu0 0.0
    %338 = vmatpush2.msra.mxu0 0.0
    %339 = vmatprep.subr.mxu0 0.0
    %340 = vmatpush2.msra.mxu0 0.0
    %341 = vmatprep.subr.mxu0 0.0
    %342 = vmatpush2.msra.mxu0 0.0
    %343 = vmatprep.subr.mxu0 0.0
    %344 = vmatpush2.msra.mxu0 0.0
    %345 = vmatprep.subr.mxu0 0.0
    %346 = vmatpush2.msra.mxu0 0.0
    %347 = vmatprep.subr.mxu0 0.0
    %348 = vmatpush2.msra.mxu0 0.0
    %349 = vmatprep.mubr.f32.mxu0 0.0
    %350 = vmatmul.mubr.f32.gmra.mxu0 %v283
    %v351 = vpop.f32.mrf.mxu0
    %v352 = vadd.f32 0.0, %v351
    %v353 = vpop.f32.mrf.mxu0
    %354 = vdwg.mxu0
    %v355 = vadd.f32 %v281, %v352
    %v356 = vtanh.pop %v355
    %s357 = scalar_lea.vmem [#allocation3], 16
    %358 = vst.msk [vmem:[%s357] sm:$0xff] %vm114, %v356
    %s359 = scalar_lea.vmem [#allocation2], 24
    %v360 = vld [vmem:[%s359] sm:$0xff]
    %v362 = vsel %vm114, %v356, 0
    %364 = vmatprep.subr.mxu0 0.0
    %365 = vmatpush1.msra.mxu0 0.0
    %366 = vmatprep.subr.mxu0 0.0
    %367 = vmatpush1.msra.mxu0 0.0
    %368 = vmatprep.subr.mxu0 0.0
    %369 = vmatpush1.msra.mxu0 0.0
    %370 = vmatprep.subr.mxu0 0.0
    %371 = vmatpush1.msra.mxu0 0.0
    %372 = vmatprep.subr.mxu0 0.0
    %373 = vmatpush1.msra.mxu0 0.0
    %374 = vmatprep.subr.mxu0 0.0
    %375 = vmatpush1.msra.mxu0 0.0
    %376 = vmatprep.subr.mxu0 0.0
    %377 = vmatpush1.msra.mxu0 0.0
    %378 = vmatprep.subr.mxu0 0.0
    %379 = vmatpush1.msra.mxu0 0.0
    %380 = vmatprep.subr.mxu0 0.0
    %381 = vmatpush1.msra.mxu0 0.0
    %382 = vmatprep.subr.mxu0 0.0
    %383 = vmatpush1.msra.mxu0 0.0
    %384 = vmatprep.subr.mxu0 0.0
    %385 = vmatpush1.msra.mxu0 0.0
    %386 = vmatprep.subr.mxu0 0.0
    %387 = vmatpush1.msra.mxu0 0.0
    %388 = vmatprep.subr.mxu0 0.0
    %389 = vmatpush1.msra.mxu0 %v37
    %390 = vmatprep.subr.mxu0 0.0
    %391 = vmatpush1.msra.mxu0 %v36
    %392 = vmatprep.subr.mxu0 0.0
    %393 = vmatpush1.msra.mxu0 %v35
    %394 = vmatprep.subr.mxu0 0.0
    %395 = vmatpush1.msra.mxu0 %v34
    %396 = vmatprep.subr.mxu0 0.0
    %397 = vmatpush2.msra.mxu0 0.0
    %398 = vmatprep.subr.mxu0 0.0
    %399 = vmatpush2.msra.mxu0 0.0
    %400 = vmatprep.subr.mxu0 0.0
    %401 = vmatpush2.msra.mxu0 0.0
    %402 = vmatprep.subr.mxu0 0.0
    %403 = vmatpush2.msra.mxu0 0.0
    %404 = vmatprep.subr.mxu0 0.0
    %405 = vmatpush2.msra.mxu0 0.0
    %406 = vmatprep.subr.mxu0 0.0
    %407 = vmatpush2.msra.mxu0 0.0
    %408 = vmatprep.subr.mxu0 0.0
    %409 = vmatpush2.msra.mxu0 0.0
    %410 = vmatprep.subr.mxu0 0.0
    %411 = vmatpush2.msra.mxu0 0.0
    %412 = vmatprep.subr.mxu0 0.0
    %413 = vmatpush2.msra.mxu0 0.0
    %414 = vmatprep.subr.mxu0 0.0
    %415 = vmatpush2.msra.mxu0 0.0
    %416 = vmatprep.subr.mxu0 0.0
    %417 = vmatpush2.msra.mxu0 0.0
    %418 = vmatprep.subr.mxu0 0.0
    %419 = vmatpush2.msra.mxu0 0.0
    %420 = vmatprep.subr.mxu0 0.0
    %421 = vmatpush2.msra.mxu0 0.0
    %422 = vmatprep.subr.mxu0 0.0
    %423 = vmatpush2.msra.mxu0 0.0
    %424 = vmatprep.subr.mxu0 0.0
    %425 = vmatpush2.msra.mxu0 0.0
    %426 = vmatprep.subr.mxu0 0.0
    %427 = vmatpush2.msra.mxu0 0.0
    %428 = vmatprep.mubr.f32.mxu0 0.0
    %429 = vmatmul.mubr.f32.gmra.mxu0 %v362
    %v430 = vpop.f32.mrf.mxu0
    %v431 = vadd.f32 0.0, %v430
    %v432 = vpop.f32.mrf.mxu0
    %433 = vdwg.mxu0
    %v434 = vadd.f32 %v360, %v431
    %v435 = vtanh.pop %v434
    %s436 = scalar_lea.vmem [#allocation3], 24
    %437 = vst.msk [vmem:[%s436] sm:$0xff] %vm114, %v435
    %s438 = scalar_lea.vmem [#allocation2], 32
    %v439 = vld [vmem:[%s438] sm:$0xff]
    %v441 = vsel %vm114, %v435, 0
    %443 = vmatprep.subr.mxu0 0.0
    %444 = vmatpush1.msra.mxu0 0.0
    %445 = vmatprep.subr.mxu0 0.0
    %446 = vmatpush1.msra.mxu0 0.0
    %447 = vmatprep.subr.mxu0 0.0
    %448 = vmatpush1.msra.mxu0 0.0
    %449 = vmatprep.subr.mxu0 0.0
    %450 = vmatpush1.msra.mxu0 0.0
    %451 = vmatprep.subr.mxu0 0.0
    %452 = vmatpush1.msra.mxu0 0.0
    %453 = vmatprep.subr.mxu0 0.0
    %454 = vmatpush1.msra.mxu0 0.0
    %455 = vmatprep.subr.mxu0 0.0
    %456 = vmatpush1.msra.mxu0 0.0
    %457 = vmatprep.subr.mxu0 0.0
    %458 = vmatpush1.msra.mxu0 0.0
    %459 = vmatprep.subr.mxu0 0.0
    %460 = vmatpush1.msra.mxu0 0.0
    %461 = vmatprep.subr.mxu0 0.0
    %462 = vmatpush1.msra.mxu0 0.0
    %463 = vmatprep.subr.mxu0 0.0
    %464 = vmatpush1.msra.mxu0 0.0
    %465 = vmatprep.subr.mxu0 0.0
    %466 = vmatpush1.msra.mxu0 0.0
    %467 = vmatprep.subr.mxu0 0.0
    %468 = vmatpush1.msra.mxu0 %v37
    %469 = vmatprep.subr.mxu0 0.0
    %470 = vmatpush1.msra.mxu0 %v36
    %471 = vmatprep.subr.mxu0 0.0
    %472 = vmatpush1.msra.mxu0 %v35
    %473 = vmatprep.subr.mxu0 0.0
    %474 = vmatpush1.msra.mxu0 %v34
    %475 = vmatprep.subr.mxu0 0.0
    %476 = vmatpush2.msra.mxu0 0.0
    %477 = vmatprep.subr.mxu0 0.0
    %478 = vmatpush2.msra.mxu0 0.0
    %479 = vmatprep.subr.mxu0 0.0
    %480 = vmatpush2.msra.mxu0 0.0
    %481 = vmatprep.subr.mxu0 0.0
    %482 = vmatpush2.msra.mxu0 0.0
    %483 = vmatprep.subr.mxu0 0.0
    %484 = vmatpush2.msra.mxu0 0.0
    %485 = vmatprep.subr.mxu0 0.0
    %486 = vmatpush2.msra.mxu0 0.0
    %487 = vmatprep.subr.mxu0 0.0
    %488 = vmatpush2.msra.mxu0 0.0
    %489 = vmatprep.subr.mxu0 0.0
    %490 = vmatpush2.msra.mxu0 0.0
    %491 = vmatprep.subr.mxu0 0.0
    %492 = vmatpush2.msra.mxu0 0.0
    %493 = vmatprep.subr.mxu0 0.0
    %494 = vmatpush2.msra.mxu0 0.0
    %495 = vmatprep.subr.mxu0 0.0
    %496 = vmatpush2.msra.mxu0 0.0
    %497 = vmatprep.subr.mxu0 0.0
    %498 = vmatpush2.msra.mxu0 0.0
    %499 = vmatprep.subr.mxu0 0.0
    %500 = vmatpush2.msra.mxu0 0.0
    %501 = vmatprep.subr.mxu0 0.0
    %502 = vmatpush2.msra.mxu0 0.0
    %503 = vmatprep.subr.mxu0 0.0
    %504 = vmatpush2.msra.mxu0 0.0
    %505 = vmatprep.subr.mxu0 0.0
    %506 = vmatpush2.msra.mxu0 0.0
    %507 = vmatprep.mubr.f32.mxu0 0.0
    %508 = vmatmul.mubr.f32.gmra.mxu0 %v441
    %v509 = vpop.f32.mrf.mxu0
    %v510 = vadd.f32 0.0, %v509
    %v511 = vpop.f32.mrf.mxu0
    %512 = vdwg.mxu0
    %v513 = vadd.f32 %v439, %v510
    %v514 = vtanh.pop %v513
    %s515 = scalar_lea.vmem [#allocation3], 32
    %516 = vst.msk [vmem:[%s515] sm:$0xff] %vm114, %v514
    %s517 = scalar_lea.vmem [#allocation2], 40
    %v518 = vld [vmem:[%s517] sm:$0xff]
    %v520 = vsel %vm114, %v514, 0
    %522 = vmatprep.subr.mxu0 0.0
    %523 = vmatpush1.msra.mxu0 0.0
    %524 = vmatprep.subr.mxu0 0.0
    %525 = vmatpush1.msra.mxu0 0.0
    %526 = vmatprep.subr.mxu0 0.0
    %527 = vmatpush1.msra.mxu0 0.0
    %528 = vmatprep.subr.mxu0 0.0
    %529 = vmatpush1.msra.mxu0 0.0
    %530 = vmatprep.subr.mxu0 0.0
    %531 = vmatpush1.msra.mxu0 0.0
    %532 = vmatprep.subr.mxu0 0.0
    %533 = vmatpush1.msra.mxu0 0.0
    %534 = vmatprep.subr.mxu0 0.0
    %535 = vmatpush1.msra.mxu0 0.0
    %536 = vmatprep.subr.mxu0 0.0
    %537 = vmatpush1.msra.mxu0 0.0
    %538 = vmatprep.subr.mxu0 0.0
    %539 = vmatpush1.msra.mxu0 0.0
    %540 = vmatprep.subr.mxu0 0.0
    %541 = vmatpush1.msra.mxu0 0.0
    %542 = vmatprep.subr.mxu0 0.0
    %543 = vmatpush1.msra.mxu0 0.0
    %544 = vmatprep.subr.mxu0 0.0
    %545 = vmatpush1.msra.mxu0 0.0
    %546 = vmatprep.subr.mxu0 0.0
    %547 = vmatpush1.msra.mxu0 %v37
    %548 = vmatprep.subr.mxu0 0.0
    %549 = vmatpush1.msra.mxu0 %v36
    %550 = vmatprep.subr.mxu0 0.0
    %551 = vmatpush1.msra.mxu0 %v35
    %552 = vmatprep.subr.mxu0 0.0
    %553 = vmatpush1.msra.mxu0 %v34
    %554 = vmatprep.subr.mxu0 0.0
    %555 = vmatpush2.msra.mxu0 0.0
    %556 = vmatprep.subr.mxu0 0.0
    %557 = vmatpush2.msra.mxu0 0.0
    %558 = vmatprep.subr.mxu0 0.0
    %559 = vmatpush2.msra.mxu0 0.0
    %560 = vmatprep.subr.mxu0 0.0
    %561 = vmatpush2.msra.mxu0 0.0
    %562 = vmatprep.subr.mxu0 0.0
    %563 = vmatpush2.msra.mxu0 0.0
    %564 = vmatprep.subr.mxu0 0.0
    %565 = vmatpush2.msra.mxu0 0.0
    %566 = vmatprep.subr.mxu0 0.0
    %567 = vmatpush2.msra.mxu0 0.0
    %568 = vmatprep.subr.mxu0 0.0
    %569 = vmatpush2.msra.mxu0 0.0
    %570 = vmatprep.subr.mxu0 0.0
    %571 = vmatpush2.msra.mxu0 0.0
    %572 = vmatprep.subr.mxu0 0.0
    %573 = vmatpush2.msra.mxu0 0.0
    %574 = vmatprep.subr.mxu0 0.0
    %575 = vmatpush2.msra.mxu0 0.0
    %576 = vmatprep.subr.mxu0 0.0
    %577 = vmatpush2.msra.mxu0 0.0
    %578 = vmatprep.subr.mxu0 0.0
    %579 = vmatpush2.msra.mxu0 0.0
    %580 = vmatprep.subr.mxu0 0.0
    %581 = vmatpush2.msra.mxu0 0.0
    %582 = vmatprep.subr.mxu0 0.0
    %583 = vmatpush2.msra.mxu0 0.0
    %584 = vmatprep.subr.mxu0 0.0
    %585 = vmatpush2.msra.mxu0 0.0
    %586 = vmatprep.mubr.f32.mxu0 0.0
    %587 = vmatmul.mubr.f32.gmra.mxu0 %v520
    %v588 = vpop.f32.mrf.mxu0
    %v589 = vadd.f32 0.0, %v588
    %v590 = vpop.f32.mrf.mxu0
    %591 = vdwg.mxu0
    %v592 = vadd.f32 %v518, %v589
    %v593 = vtanh.pop %v592
    %s594 = scalar_lea.vmem [#allocation3], 40
    %595 = vst.msk [vmem:[%s594] sm:$0xff] %vm114, %v593
    %s596 = scalar_lea.vmem [#allocation2], 48
    %v597 = vld [vmem:[%s596] sm:$0xff]
    %v599 = vsel %vm114, %v593, 0
    %601 = vmatprep.subr.mxu0 0.0
    %602 = vmatpush1.msra.mxu0 0.0
    %603 = vmatprep.subr.mxu0 0.0
    %604 = vmatpush1.msra.mxu0 0.0
    %605 = vmatprep.subr.mxu0 0.0
    %606 = vmatpush1.msra.mxu0 0.0
    %607 = vmatprep.subr.mxu0 0.0
    %608 = vmatpush1.msra.mxu0 0.0
    %609 = vmatprep.subr.mxu0 0.0
    %610 = vmatpush1.msra.mxu0 0.0
    %611 = vmatprep.subr.mxu0 0.0
    %612 = vmatpush1.msra.mxu0 0.0
    %613 = vmatprep.subr.mxu0 0.0
    %614 = vmatpush1.msra.mxu0 0.0
    %615 = vmatprep.subr.mxu0 0.0
    %616 = vmatpush1.msra.mxu0 0.0
    %617 = vmatprep.subr.mxu0 0.0
    %618 = vmatpush1.msra.mxu0 0.0
    %619 = vmatprep.subr.mxu0 0.0
    %620 = vmatpush1.msra.mxu0 0.0
    %621 = vmatprep.subr.mxu0 0.0
    %622 = vmatpush1.msra.mxu0 0.0
    %623 = vmatprep.subr.mxu0 0.0
    %624 = vmatpush1.msra.mxu0 0.0
    %625 = vmatprep.subr.mxu0 0.0
    %626 = vmatpush1.msra.mxu0 %v37
    %627 = vmatprep.subr.mxu0 0.0
    %628 = vmatpush1.msra.mxu0 %v36
    %629 = vmatprep.subr.mxu0 0.0
    %630 = vmatpush1.msra.mxu0 %v35
    %631 = vmatprep.subr.mxu0 0.0
    %632 = vmatpush1.msra.mxu0 %v34
    %633 = vmatprep.subr.mxu0 0.0
    %634 = vmatpush2.msra.mxu0 0.0
    %635 = vmatprep.subr.mxu0 0.0
    %636 = vmatpush2.msra.mxu0 0.0
    %637 = vmatprep.subr.mxu0 0.0
    %638 = vmatpush2.msra.mxu0 0.0
    %639 = vmatprep.subr.mxu0 0.0
    %640 = vmatpush2.msra.mxu0 0.0
    %641 = vmatprep.subr.mxu0 0.0
    %642 = vmatpush2.msra.mxu0 0.0
    %643 = vmatprep.subr.mxu0 0.0
    %644 = vmatpush2.msra.mxu0 0.0
    %645 = vmatprep.subr.mxu0 0.0
    %646 = vmatpush2.msra.mxu0 0.0
    %647 = vmatprep.subr.mxu0 0.0
    %648 = vmatpush2.msra.mxu0 0.0
    %649 = vmatprep.subr.mxu0 0.0
    %650 = vmatpush2.msra.mxu0 0.0
    %651 = vmatprep.subr.mxu0 0.0
    %652 = vmatpush2.msra.mxu0 0.0
    %653 = vmatprep.subr.mxu0 0.0
    %654 = vmatpush2.msra.mxu0 0.0
    %655 = vmatprep.subr.mxu0 0.0
    %656 = vmatpush2.msra.mxu0 0.0
    %657 = vmatprep.subr.mxu0 0.0
    %658 = vmatpush2.msra.mxu0 0.0
    %659 = vmatprep.subr.mxu0 0.0
    %660 = vmatpush2.msra.mxu0 0.0
    %661 = vmatprep.subr.mxu0 0.0
    %662 = vmatpush2.msra.mxu0 0.0
    %663 = vmatprep.subr.mxu0 0.0
    %664 = vmatpush2.msra.mxu0 0.0
    %665 = vmatprep.mubr.f32.mxu0 0.0
    %666 = vmatmul.mubr.f32.gmra.mxu0 %v599
    %v667 = vpop.f32.mrf.mxu0
    %v668 = vadd.f32 0.0, %v667
    %v669 = vpop.f32.mrf.mxu0
    %670 = vdwg.mxu0
    %v671 = vadd.f32 %v597, %v668
    %v672 = vtanh.pop %v671
    %s673 = scalar_lea.vmem [#allocation3], 48
    %674 = vst.msk [vmem:[%s673] sm:$0xff] %vm114, %v672
    %s675 = scalar_lea.vmem [#allocation2], 56
    %v676 = vld [vmem:[%s675] sm:$0xff]
    %v678 = vsel %vm114, %v672, 0
    %680 = vmatprep.subr.mxu0 0.0
    %681 = vmatpush1.msra.mxu0 0.0
    %682 = vmatprep.subr.mxu0 0.0
    %683 = vmatpush1.msra.mxu0 0.0
    %684 = vmatprep.subr.mxu0 0.0
    %685 = vmatpush1.msra.mxu0 0.0
    %686 = vmatprep.subr.mxu0 0.0
    %687 = vmatpush1.msra.mxu0 0.0
    %688 = vmatprep.subr.mxu0 0.0
    %689 = vmatpush1.msra.mxu0 0.0
    %690 = vmatprep.subr.mxu0 0.0
    %691 = vmatpush1.msra.mxu0 0.0
    %692 = vmatprep.subr.mxu0 0.0
    %693 = vmatpush1.msra.mxu0 0.0
    %694 = vmatprep.subr.mxu0 0.0
    %695 = vmatpush1.msra.mxu0 0.0
    %696 = vmatprep.subr.mxu0 0.0
    %697 = vmatpush1.msra.mxu0 0.0
    %698 = vmatprep.subr.mxu0 0.0
    %699 = vmatpush1.msra.mxu0 0.0
    %700 = vmatprep.subr.mxu0 0.0
    %701 = vmatpush1.msra.mxu0 0.0
    %702 = vmatprep.subr.mxu0 0.0
    %703 = vmatpush1.msra.mxu0 0.0
    %704 = vmatprep.subr.mxu0 0.0
    %705 = vmatpush1.msra.mxu0 %v37
    %706 = vmatprep.subr.mxu0 0.0
    %707 = vmatpush1.msra.mxu0 %v36
    %708 = vmatprep.subr.mxu0 0.0
    %709 = vmatpush1.msra.mxu0 %v35
    %710 = vmatprep.subr.mxu0 0.0
    %711 = vmatpush1.msra.mxu0 %v34
    %712 = vmatprep.subr.mxu0 0.0
    %713 = vmatpush2.msra.mxu0 0.0
    %714 = vmatprep.subr.mxu0 0.0
    %715 = vmatpush2.msra.mxu0 0.0
    %716 = vmatprep.subr.mxu0 0.0
    %717 = vmatpush2.msra.mxu0 0.0
    %718 = vmatprep.subr.mxu0 0.0
    %719 = vmatpush2.msra.mxu0 0.0
    %720 = vmatprep.subr.mxu0 0.0
    %721 = vmatpush2.msra.mxu0 0.0
    %722 = vmatprep.subr.mxu0 0.0
    %723 = vmatpush2.msra.mxu0 0.0
    %724 = vmatprep.subr.mxu0 0.0
    %725 = vmatpush2.msra.mxu0 0.0
    %726 = vmatprep.subr.mxu0 0.0
    %727 = vmatpush2.msra.mxu0 0.0
    %728 = vmatprep.subr.mxu0 0.0
    %729 = vmatpush2.msra.mxu0 0.0
    %730 = vmatprep.subr.mxu0 0.0
    %731 = vmatpush2.msra.mxu0 0.0
    %732 = vmatprep.subr.mxu0 0.0
    %733 = vmatpush2.msra.mxu0 0.0
    %734 = vmatprep.subr.mxu0 0.0
    %735 = vmatpush2.msra.mxu0 0.0
    %736 = vmatprep.subr.mxu0 0.0
    %737 = vmatpush2.msra.mxu0 0.0
    %738 = vmatprep.subr.mxu0 0.0
    %739 = vmatpush2.msra.mxu0 0.0
    %740 = vmatprep.subr.mxu0 0.0
    %741 = vmatpush2.msra.mxu0 0.0
    %742 = vmatprep.subr.mxu0 0.0
    %743 = vmatpush2.msra.mxu0 0.0
    %744 = vmatprep.mubr.f32.mxu0 0.0
    %745 = vmatmul.mubr.f32.gmra.mxu0 %v678
    %v746 = vpop.f32.mrf.mxu0
    %v747 = vadd.f32 0.0, %v746
    %v748 = vpop.f32.mrf.mxu0
    %749 = vdwg.mxu0
    %v750 = vadd.f32 %v676, %v747
    %v751 = vtanh.pop %v750
    %s752 = scalar_lea.vmem [#allocation3], 56
    %753 = vst.msk [vmem:[%s752] sm:$0xff] %vm114, %v751
    %754 = vst.msk [vmem:[#allocation7] sm:$0xff] %vm114, %v751
    %v755 = vld [vmem:[%s5] sm:$0x1]
    %v756 = vld [vmem:[#allocation3] sm:$0xff]
    %v757 = vld [vmem:[#allocation3 + $0x8] sm:$0xff]
    %v758 = vld [vmem:[#allocation3 + $0x10] sm:$0xff]
    %v759 = vld [vmem:[#allocation3 + $0x18] sm:$0xff]
    %v760 = vld [vmem:[#allocation3 + $0x20] sm:$0xff]
    %v761 = vld [vmem:[#allocation3 + $0x28] sm:$0xff]
    %v762 = vld [vmem:[#allocation3 + $0x30] sm:$0xff]
    %v763 = vld [vmem:[#allocation3 + $0x38] sm:$0xff]
    %v765 = vlaneseq
    %v766 = vshrl.u32 %v765, 7
    %v767 = vsub.s32 0, %v766
    %v768 = vrot.slane %v755, %v767
    %v770 = vmul.f32 %v756, %v768
    %v771 = vmul.f32 %v757, %v768
    %v772 = vmul.f32 %v758, %v768
    %v773 = vmul.f32 %v759, %v768
    %v774 = vmul.f32 %v760, %v768
    %v775 = vmul.f32 %v761, %v768
    %v776 = vmul.f32 %v762, %v768
    %v777 = vmul.f32 %v763, %v768
    %v778 = vsel %vm114, %v770, 0.0
    %779 = vadd.xlane.f32.xlu0 %v778
    %v780 = vpop.xlane.xlu0 %779
    %v781 = vsel %vm114, %v771, 0.0
    %782 = vadd.xlane.f32.xlu0 %v781
    %v783 = vpop.xlane.xlu0 %782
    %v784 = vsel %vm114, %v772, 0.0
    %785 = vadd.xlane.f32.xlu0 %v784
    %v786 = vpop.xlane.xlu0 %785
    %v787 = vsel %vm114, %v773, 0.0
    %788 = vadd.xlane.f32.xlu0 %v787
    %v789 = vpop.xlane.xlu0 %788
    %v790 = vsel %vm114, %v774, 0.0
    %791 = vadd.xlane.f32.xlu0 %v790
    %v792 = vpop.xlane.xlu0 %791
    %v793 = vsel %vm114, %v775, 0.0
    %794 = vadd.xlane.f32.xlu0 %v793
    %v795 = vpop.xlane.xlu0 %794
    %v796 = vsel %vm114, %v776, 0.0
    %797 = vadd.xlane.f32.xlu0 %v796
    %v798 = vpop.xlane.xlu0 %797
    %v799 = vsel %vm114, %v777, 0.0
    %800 = vadd.xlane.f32.xlu0 %v799
    %v801 = vpop.xlane.xlu0 %800
    %v802 = vld [vmem:[#allocation4] sm:$0x1]
    %v804 = vlaneseq
    %v805 = vshrl.u32 %v804, 7
    %v806 = vsub.s32 0, %v805
    %v807 = vrot.slane %v802, %v806
    %808 = vset.pattern.permute.xlu0 0
    %809 = vperm.xlu0 %808, %v807
    %v810 = vpop.permute.xlu0 %809
    %v812 = vadd.f32 %v780, %v810
    %v813 = vadd.f32 %v783, %v810
    %v814 = vadd.f32 %v786, %v810
    %v815 = vadd.f32 %v789, %v810
    %v816 = vadd.f32 %v792, %v810
    %v817 = vadd.f32 %v795, %v810
    %v818 = vadd.f32 %v798, %v810
    %v819 = vadd.f32 %v801, %v810
    %v828 = vlaneseq
    %v829 = vand.u32 %v828, 127
    %v830 = vlaneseq
    %v831 = vshrl.u32 %v830, 7
    %v832 = vsub.s32 %v829, %v831
    %v833 = vrot.slane %v812, %v832
    %v834 = vlaneseq
    %v835 = vshrl.u32 %v834, 7
    %v836 = vsub.s32 %v829, %v835
    %v837 = vrot.slane %v813, %v836
    %v838 = vlaneseq
    %v839 = vshrl.u32 %v838, 7
    %v840 = vsub.s32 %v829, %v839
    %v841 = vrot.slane %v814, %v840
    %v842 = vlaneseq
    %v843 = vshrl.u32 %v842, 7
    %v844 = vsub.s32 %v829, %v843
    %v845 = vrot.slane %v815, %v844
    %v846 = vlaneseq
    %v847 = vshrl.u32 %v846, 7
    %v848 = vsub.s32 %v829, %v847
    %v849 = vrot.slane %v816, %v848
    %v850 = vlaneseq
    %v851 = vshrl.u32 %v850, 7
    %v852 = vsub.s32 %v829, %v851
    %v853 = vrot.slane %v817, %v852
    %v854 = vlaneseq
    %v855 = vshrl.u32 %v854, 7
    %v856 = vsub.s32 %v829, %v855
    %v857 = vrot.slane %v818, %v856
    %v858 = vlaneseq
    %v859 = vshrl.u32 %v858, 7
    %v860 = vsub.s32 %v829, %v859
    %v861 = vrot.slane %v819, %v860
    %vm862 = vcmask 1041409
    %v863 = vsel %vm862, %v837, %v833
    %vm864 = vcmask 1042434
    %v865 = vsel %vm864, %v841, %v863
    %vm866 = vcmask 1043459
    %v867 = vsel %vm866, %v845, %v865
    %vm868 = vcmask 1044484
    %v869 = vsel %vm868, %v849, %v867
    %vm870 = vcmask 1045509
    %v871 = vsel %vm870, %v853, %v869
    %vm872 = vcmask 1046534
    %v873 = vsel %vm872, %v857, %v871
    %vm874 = vcmask 1047559
    %v875 = vsel %vm874, %v861, %v873
    %vm877 = vcmask 64512
    %878 = vst.msk [vmem:[#allocation5] sm:$0xff] %vm877, %v875
    // Predicated region
    $region30: #{tpu_custom_call.1} parent=1 // pred_check
      _
    $region31: #{tpu_custom_call.1} parent=1 // pred_check_branch
      %880 = sbr.rel (0) target = $region33
    $region32: #{tpu_custom_call.1} parent=1 // pred_region
      %s882 = ssub.s32 128, 128
      %883 = vsyncadd [#allocation6], %s882
      %s885 = sshll.u32 [#allocation5], 4
      %s886 = int_to_ptr.vmem [resolvable:$true] %s885
      %888 = dma.vmem_to_hbm [thread:$0]  %s886, 128, %s7, [#allocation6]
    $region33: #{tpu_custom_call.1} parent=1 // pred_fallthru
      _
    // Predicated region
    $region34: #{tpu_custom_call.1} parent=1 // pred_check
      _
    $region35: #{tpu_custom_call.1} parent=1 // pred_check_branch
      %890 = sbr.rel (0) target = $region37
    $region36: #{tpu_custom_call.1} parent=1 // pred_region
      %s892 = ssub.s32 128, 128
      %893 = vsyncadd [#allocation8], %s892
      %s895 = sshll.u32 [#allocation7], 4
      %s896 = int_to_ptr.vmem [resolvable:$true] %s895
      %898 = dma.vmem_to_hbm [thread:$0]  %s896, 128, %s8, [#allocation8]
    $region37: #{tpu_custom_call.1} parent=1 // pred_fallthru
      _
    // Predicated region
    $region38: #{tpu_custom_call.1} parent=1 // pred_check
      _
    $region39: #{tpu_custom_call.1} parent=1 // pred_check_branch
      %900 = sbr.rel (0) target = $region41
    $region40: #{tpu_custom_call.1} parent=1 // pred_region
      %901 = dma.done [#allocation6], 128
    $region41: #{tpu_custom_call.1} parent=1 // pred_fallthru
      _
    // Predicated region
    $region42: #{tpu_custom_call.1} parent=1 // pred_check
      _
    $region43: #{tpu_custom_call.1} parent=1 // pred_check_branch
      %903 = sbr.rel (0) target = $region45
    $region44: #{tpu_custom_call.1} parent=1 // pred_region
      %904 = dma.done [#allocation8], 128
    $region45: #{tpu_custom_call.1} parent=1 // pred_fallthru
      _
    %905 = vsyncpa [#allocation6], 1
    %906 = vsyncpa [#allocation8], 1

</llo_original>
